<compile_context>
chip_gen: v5e
topology: v5e:2x2
jax: 0.10.0
libtpu: 0.0.40
codegen_flags: <defaults>
</compile_context>

<pallas_src>
import numpy as np
import jax
import jax.numpy as jnp
from jax.experimental import pallas as pl
from jax.experimental.pallas import tpu as pltpu

EPS = 1e-5


def batchnorm2d_flatten(x):
    """x: (N, C, H, W) float32. Returns bn(x).reshape(N, C*H*W) (training-mode BN,
    affine weight=1 / bias=0)."""
    N, C, H, W = x.shape
    HW = H * W
    CHW = C * HW
    inv_count = 1.0 / float(N * HW)

    # Free view: contiguous NCHW row-major -> (N, C*H*W). Channel c owns the
    # lane range [c*HW, (c+1)*HW) of every row.
    x_flat = x.reshape(N, CHW)

    # Host-built one-hot channel selector (CHW, C): sel[j, c] = 1 if element j
    # belongs to channel c.  ~9 KiB f32; its DMA hides under kernel startup.
    ch_of_elem = np.arange(CHW) // HW
    sel_np = (ch_of_elem[:, None] == np.arange(C)[None, :]).astype(np.float32)
    sel = jnp.asarray(sel_np)

    def kernel(x_ref, sel_ref, o_ref):
        xv = x_ref[...].astype(jnp.float32)        # (N, CHW)
        sel_v = sel_ref[...]                       # (CHW, C)

        # One MXU op for both per-channel sum and sum-of-squares:
        # [x ; x*x] : (2N, CHW) @ (CHW, C) -> (2N, C)
        stacked = jnp.concatenate([xv, xv * xv], axis=0)
        sums = jax.lax.dot_general(
            stacked, sel_v,
            dimension_numbers=(((1,), (0,)), ((), ())),
            preferred_element_type=jnp.float32,
            precision=jax.lax.Precision.HIGHEST)   # (2N, C)

        mean = jnp.sum(sums[:N, :], axis=0, keepdims=True) * inv_count   # (1, C)
        ex2 = jnp.sum(sums[N:, :], axis=0, keepdims=True) * inv_count    # (1, C)
        var = jnp.maximum(ex2 - mean * mean, 0.0)  # biased var, clamp cancellation
        inv = jax.lax.rsqrt(var + EPS)             # (1, C)

        # Affine defaults (weight=1, bias=0): scale = inv, shift = -mean*inv.
        # Broadcast per-channel -> per-element with one matmul: (2, C) @ sel.T
        coef = jnp.concatenate([inv, -mean * inv], axis=0)               # (2, C)
        coef_e = jax.lax.dot_general(
            coef, sel_v,
            dimension_numbers=(((1,), (1,)), ((), ())),
            preferred_element_type=jnp.float32,
            precision=jax.lax.Precision.HIGHEST)   # (2, CHW)
        scale_e = coef_e[0:1, :]                   # (1, CHW)
        shift_e = coef_e[1:2, :]                   # (1, CHW)

        o_ref[...] = (xv * scale_e + shift_e).astype(o_ref.dtype)        # (N, CHW)

    return pl.pallas_call(
        kernel,
        out_shape=jax.ShapeDtypeStruct((N, CHW), x.dtype),
        in_specs=[
            pl.BlockSpec(memory_space=pltpu.MemorySpace.VMEM),
            pl.BlockSpec(memory_space=pltpu.MemorySpace.VMEM),
        ],
        out_specs=pl.BlockSpec(memory_space=pltpu.MemorySpace.VMEM),
    )(x_flat, sel)


if __name__ == "__main__":
    key = jax.random.PRNGKey(0)
    # Shapes consistent with bn1=BatchNorm2d(16) and the 16*3*3 flatten size.
    N, C, H, W = 2, 16, 3, 3
    x = jax.random.normal(key, (N, C, H, W), dtype=jnp.float32)

    out = batchnorm2d_flatten(x)
    jax.block_until_ready(out)

    # Reference check in plain JAX (training-mode BN with batch statistics,
    # affine weight=1 / bias=0 as in a freshly constructed BatchNorm2d).
    mean = jnp.mean(x, axis=(0, 2, 3), keepdims=True)
    var = jnp.mean((x - mean) ** 2, axis=(0, 2, 3), keepdims=True)
    ref = ((x - mean) * jax.lax.rsqrt(var + EPS)).reshape(N, C * H * W)
    assert out.shape == (N, C * H * W)
    assert jnp.max(jnp.abs(out - ref)) < 1e-4

    print("KERNEL_OK")
</pallas_src>

<mosaic_0001>
module attributes {stable_mosaic.version = 11 : i64} {
  func.func @kernel(%arg0: memref<2x144xf32, #tpu.memory_space<vmem>>, %arg1: memref<144x16xf32, #tpu.memory_space<vmem>>, %arg2: memref<2x144xf32, #tpu.memory_space<vmem>>) attributes {dimension_semantics = [], scalar_prefetch = 0 : i64, scratch_operands = 0 : i64, tpu.core_type = #tpu.core_type<tc>} {
    %c0 = arith.constant 0 : index
    %c0_0 = arith.constant 0 : index
    %0 = vector.load %arg0[%c0, %c0_0] : memref<2x144xf32, #tpu.memory_space<vmem>>, vector<2x144xf32>
    %c0_1 = arith.constant 0 : index
    %c0_2 = arith.constant 0 : index
    %1 = vector.load %arg1[%c0_1, %c0_2] : memref<144x16xf32, #tpu.memory_space<vmem>>, vector<144x16xf32>
    %2 = arith.mulf %0, %0 : vector<2x144xf32>
    %3 = tpu.concatenate %0, %2 in 0 : vector<2x144xf32>, vector<2x144xf32> -> vector<4x144xf32>
    %cst = arith.constant dense<0.000000e+00> : vector<4x16xf32>
    %4 = tpu.matmul %3, %1, %cst {dimension_numbers = #tpu.dot_dimension_numbers<[1], [0], [0], [1], [0, 0, 1, 1], [], []>, precision = #tpu.contract_precision<fp32>} : vector<4x144xf32>, vector<144x16xf32>, vector<4x16xf32> -> vector<4x16xf32>
    %5 = vector.extract_strided_slice %4 {offsets = [0, 0], sizes = [2, 16], strides = [1, 1]} : vector<4x16xf32> to vector<2x16xf32>
    %cst_3 = arith.constant dense<0.000000e+00> : vector<16xf32>
    %6 = vector.multi_reduction <add>, %5, %cst_3 [0] : vector<2x16xf32> to vector<16xf32>
    %7 = vector.shape_cast %6 : vector<16xf32> to vector<1x16xf32>
    %cst_4 = arith.constant 0.055555556 : f32
    %8 = vector.broadcast %cst_4 : f32 to vector<1x16xf32>
    %9 = arith.mulf %7, %8 : vector<1x16xf32>
    %10 = vector.extract_strided_slice %4 {offsets = [2, 0], sizes = [2, 16], strides = [1, 1]} : vector<4x16xf32> to vector<2x16xf32>
    %cst_5 = arith.constant dense<0.000000e+00> : vector<16xf32>
    %11 = vector.multi_reduction <add>, %10, %cst_5 [0] : vector<2x16xf32> to vector<16xf32>
    %12 = vector.shape_cast %11 : vector<16xf32> to vector<1x16xf32>
    %cst_6 = arith.constant 0.055555556 : f32
    %13 = vector.broadcast %cst_6 : f32 to vector<1x16xf32>
    %14 = arith.mulf %12, %13 : vector<1x16xf32>
    %15 = arith.mulf %9, %9 : vector<1x16xf32>
    %16 = arith.subf %14, %15 : vector<1x16xf32>
    %cst_7 = arith.constant 0.000000e+00 : f32
    %17 = vector.broadcast %cst_7 : f32 to vector<1x16xf32>
    %18 = arith.maximumf %16, %17 : vector<1x16xf32>
    %cst_8 = arith.constant 9.99999974E-6 : f32
    %19 = vector.broadcast %cst_8 : f32 to vector<1x16xf32>
    %20 = arith.addf %18, %19 : vector<1x16xf32>
    %21 = math.rsqrt %20 : vector<1x16xf32>
    %cst_9 = arith.constant 0.000000e+00 : f32
    %22 = vector.broadcast %cst_9 : f32 to vector<1x16xf32>
    %23 = arith.subf %22, %9 : vector<1x16xf32>
    %24 = arith.mulf %23, %21 : vector<1x16xf32>
    %25 = tpu.concatenate %21, %24 in 0 : vector<1x16xf32>, vector<1x16xf32> -> vector<2x16xf32>
    %cst_10 = arith.constant dense<0.000000e+00> : vector<2x144xf32>
    %26 = tpu.matmul %25, %1, %cst_10 {dimension_numbers = #tpu.dot_dimension_numbers<[1], [1], [0], [0], [0, 0, 1, 0], [], []>, precision = #tpu.contract_precision<fp32>} : vector<2x16xf32>, vector<144x16xf32>, vector<2x144xf32> -> vector<2x144xf32>
    %27 = vector.extract_strided_slice %26 {offsets = [0, 0], sizes = [1, 144], strides = [1, 1]} : vector<2x144xf32> to vector<1x144xf32>
    %28 = vector.extract_strided_slice %26 {offsets = [1, 0], sizes = [1, 144], strides = [1, 1]} : vector<2x144xf32> to vector<1x144xf32>
    %29 = vector.broadcast %27 : vector<1x144xf32> to vector<2x144xf32>
    %30 = arith.mulf %0, %29 : vector<2x144xf32>
    %31 = vector.broadcast %28 : vector<1x144xf32> to vector<2x144xf32>
    %32 = arith.addf %30, %31 : vector<2x144xf32>
    %c0_11 = arith.constant 0 : index
    %c0_12 = arith.constant 0 : index
    %33 = vector.load %arg2[%c0_11, %c0_12] : memref<2x144xf32, #tpu.memory_space<vmem>>, vector<2x144xf32>
    tpu.vector_store %arg2[%c0_11, %c0_12], %32 {strides = array<i32>} : memref<2x144xf32, #tpu.memory_space<vmem>>, vector<2x144xf32>,
    return
  }
}

</mosaic_0001>

<llo_original>
// kernel: tpu_custom_call.1
$region0: #{tpu_custom_call.1}
  #allocation0 [shape = 'u32[]', space=smem, size = 0x4, offset = 0x4, fixed_abs, tag = 'smem constant byte address 0x4 - core index']
  #allocation1 [shape = 'u32[72,128]{1,0:T(1,128)}', space=vmem, size = 0x9000, scoped, tag = 'internal scratch']
  %s0 = inlined_call_operand.vmem [shape: f32[2,144], index: 0, kind: input, shape index: {}]
  %s1 = inlined_call_operand.vmem [shape: f32[144,16], index: 1, kind: input, shape index: {}]
  %s2 = inlined_call_operand.hbm [shape: f32[2,144], index: 2, kind: output, shape index: {}]
  %s3 = sld [smem:[#allocation0]]
  $region18: #{tpu_custom_call.1} parent=0
    _
  %s5 = ssub.s32 1, %s3
  %s6 = scalar_select 0, %s5, %s3
  $region1: #{tpu_custom_call.1} parent=0
    #allocation2 [shape = 'u8[2048]{0}', space=vmem, size = 0x800, scoped, tag = 'output window, operand 0, single buffered']
    #allocation3 [shape = 's32[1]{0}', space=sflag, size = 0x4, scoped, tag = 'scoped memory for tpu_custom_call.1']
    %7 = vsyncpa [#allocation3], 0
    // Predicated region
    $region2: #{tpu_custom_call.1} parent=1 // pred_check
      _
    $region3: #{tpu_custom_call.1} parent=1 // pred_check_branch
      %9 = sbr.rel (0) target = $region5
    $region4: #{tpu_custom_call.1} parent=1 // pred_region
      _
    $region5: #{tpu_custom_call.1} parent=1 // pred_fallthru
      _
    // Predicated region
    $region6: #{tpu_custom_call.1} parent=1 // pred_check
      _
    $region7: #{tpu_custom_call.1} parent=1 // pred_check_branch
      %11 = sbr.rel (0) target = $region9
    $region8: #{tpu_custom_call.1} parent=1 // pred_region
      _
    $region9: #{tpu_custom_call.1} parent=1 // pred_fallthru
      _
    %v12 = vld [vmem:[%s0] sm:$0xf]
    %v13 = vld [vmem:[%s1] sm:$0xff]
    %v14 = vld [vmem:[%s1 + $0x8] sm:$0xff]
    %v15 = vld [vmem:[%s1 + $0x10] sm:$0xff]
    %v16 = vld [vmem:[%s1 + $0x18] sm:$0xff]
    %v17 = vld [vmem:[%s1 + $0x20] sm:$0xff]
    %v18 = vld [vmem:[%s1 + $0x28] sm:$0xff]
    %v19 = vld [vmem:[%s1 + $0x30] sm:$0xff]
    %v20 = vld [vmem:[%s1 + $0x38] sm:$0xff]
    %v21 = vld [vmem:[%s1 + $0x40] sm:$0xff]
    %v22 = vld [vmem:[%s1 + $0x48] sm:$0xff]
    %v23 = vld [vmem:[%s1 + $0x50] sm:$0xff]
    %v24 = vld [vmem:[%s1 + $0x58] sm:$0xff]
    %v25 = vld [vmem:[%s1 + $0x60] sm:$0xff]
    %v26 = vld [vmem:[%s1 + $0x68] sm:$0xff]
    %v27 = vld [vmem:[%s1 + $0x70] sm:$0xff]
    %v28 = vld [vmem:[%s1 + $0x78] sm:$0xff]
    %v29 = vld [vmem:[%s1 + $0x80] sm:$0xff]
    %v30 = vld [vmem:[%s1 + $0x88] sm:$0xff]
    %v31 = vmul.f32 %v12, %v12
    %33 = vst [vmem:[#allocation1] ss:$4 sm:$0xff] %v12
    %v34 = vld.sshfl [vmem:[#allocation1] sm:$0xff pattern:$0x73625140]
    %v35 = vld.sshfl [vmem:[#allocation1 + $0x8] sm:$0xff pattern:$0x73625140]
    %s39 = scalar_lea.vmem [#allocation1], 1
    %40 = vst [vmem:[%s39] ss:$4 sm:$0xff] %v31
    %v41 = vld.sshfl [vmem:[#allocation1] sm:$0xff pattern:$0x73625140]
    %v42 = vld.sshfl [vmem:[#allocation1 + $0x8] sm:$0xff pattern:$0x73625140]
    %vm45 = vcmask 1041408
    %v46 = vsel %vm45, %v34, %v41
    %v47 = vsel %vm45, %v35, %v42
    %vm48 = vcmask 130048
    %v50 = vsel %vm48, %v47, 0
    %v52 = vand.u32 %v28, 4294901760
    %53 = vmatpush.msra.mxu0 %v52
    %v54 = vand.u32 %v27, 4294901760
    %55 = vmatpush.msra.mxu0 %v54
    %v56 = vand.u32 %v26, 4294901760
    %57 = vmatpush.msra.mxu0 %v56
    %v58 = vand.u32 %v25, 4294901760
    %59 = vmatpush.msra.mxu0 %v58
    %v60 = vand.u32 %v24, 4294901760
    %61 = vmatpush.msra.mxu0 %v60
    %v62 = vand.u32 %v23, 4294901760
    %63 = vmatpush.msra.mxu0 %v62
    %v64 = vand.u32 %v22, 4294901760
    %65 = vmatpush.msra.mxu0 %v64
    %v66 = vand.u32 %v21, 4294901760
    %67 = vmatpush.msra.mxu0 %v66
    %v68 = vand.u32 %v20, 4294901760
    %69 = vmatpush.msra.mxu0 %v68
    %v70 = vand.u32 %v19, 4294901760
    %71 = vmatpush.msra.mxu0 %v70
    %v72 = vand.u32 %v18, 4294901760
    %73 = vmatpush.msra.mxu0 %v72
    %v74 = vand.u32 %v17, 4294901760
    %75 = vmatpush.msra.mxu0 %v74
    %v76 = vand.u32 %v16, 4294901760
    %77 = vmatpush.msra.mxu0 %v76
    %v78 = vand.u32 %v15, 4294901760
    %79 = vmatpush.msra.mxu0 %v78
    %v80 = vand.u32 %v14, 4294901760
    %81 = vmatpush.msra.mxu0 %v80
    %v82 = vand.u32 %v13, 4294901760
    %83 = vmatpush.msra.mxu0 %v82
    %v84 = vand.u32 %v46, 4294901760
    %v85 = vsub.f32 %v46, %v84
    %v86 = vand.u32 %v85, 4294901760
    %v87 = vsub.f32 %v85, %v86
    %v88 = vand.u32 %v87, 4294901760
    %89 = vmatmul.f32.gmra.mxu0 %v88
    %v90 = vpop.f32.mrf.mxu0
    %v91 = vadd.f32 0.0, %v90
    %92 = vdwg.mxu0
    %v93 = vand.u32 %v28, 4294901760
    %v94 = vsub.f32 %v28, %v93
    %v95 = vand.u32 %v94, 4294901760
    %v96 = vsub.f32 %v94, %v95
    %v97 = vand.u32 %v96, 4294901760
    %98 = vmatpush.msra.mxu0 %v97
    %v99 = vand.u32 %v27, 4294901760
    %v100 = vsub.f32 %v27, %v99
    %v101 = vand.u32 %v100, 4294901760
    %v102 = vsub.f32 %v100, %v101
    %v103 = vand.u32 %v102, 4294901760
    %104 = vmatpush.msra.mxu0 %v103
    %v105 = vand.u32 %v26, 4294901760
    %v106 = vsub.f32 %v26, %v105
    %v107 = vand.u32 %v106, 4294901760
    %v108 = vsub.f32 %v106, %v107
    %v109 = vand.u32 %v108, 4294901760
    %110 = vmatpush.msra.mxu0 %v109
    %v111 = vand.u32 %v25, 4294901760
    %v112 = vsub.f32 %v25, %v111
    %v113 = vand.u32 %v112, 4294901760
    %v114 = vsub.f32 %v112, %v113
    %v115 = vand.u32 %v114, 4294901760
    %116 = vmatpush.msra.mxu0 %v115
    %v117 = vand.u32 %v24, 4294901760
    %v118 = vsub.f32 %v24, %v117
    %v119 = vand.u32 %v118, 4294901760
    %v120 = vsub.f32 %v118, %v119
    %v121 = vand.u32 %v120, 4294901760
    %122 = vmatpush.msra.mxu0 %v121
    %v123 = vand.u32 %v23, 4294901760
    %v124 = vsub.f32 %v23, %v123
    %v125 = vand.u32 %v124, 4294901760
    %v126 = vsub.f32 %v124, %v125
    %v127 = vand.u32 %v126, 4294901760
    %128 = vmatpush.msra.mxu0 %v127
    %v129 = vand.u32 %v22, 4294901760
    %v130 = vsub.f32 %v22, %v129
    %v131 = vand.u32 %v130, 4294901760
    %v132 = vsub.f32 %v130, %v131
    %v133 = vand.u32 %v132, 4294901760
    %134 = vmatpush.msra.mxu0 %v133
    %v135 = vand.u32 %v21, 4294901760
    %v136 = vsub.f32 %v21, %v135
    %v137 = vand.u32 %v136, 4294901760
    %v138 = vsub.f32 %v136, %v137
    %v139 = vand.u32 %v138, 4294901760
    %140 = vmatpush.msra.mxu0 %v139
    %v141 = vand.u32 %v20, 4294901760
    %v142 = vsub.f32 %v20, %v141
    %v143 = vand.u32 %v142, 4294901760
    %v144 = vsub.f32 %v142, %v143
    %v145 = vand.u32 %v144, 4294901760
    %146 = vmatpush.msra.mxu0 %v145
    %v147 = vand.u32 %v19, 4294901760
    %v148 = vsub.f32 %v19, %v147
    %v149 = vand.u32 %v148, 4294901760
    %v150 = vsub.f32 %v148, %v149
    %v151 = vand.u32 %v150, 4294901760
    %152 = vmatpush.msra.mxu0 %v151
    %v153 = vand.u32 %v18, 4294901760
    %v154 = vsub.f32 %v18, %v153
    %v155 = vand.u32 %v154, 4294901760
    %v156 = vsub.f32 %v154, %v155
    %v157 = vand.u32 %v156, 4294901760
    %158 = vmatpush.msra.mxu0 %v157
    %v159 = vand.u32 %v17, 4294901760
    %v160 = vsub.f32 %v17, %v159
    %v161 = vand.u32 %v160, 4294901760
    %v162 = vsub.f32 %v160, %v161
    %v163 = vand.u32 %v162, 4294901760
    %164 = vmatpush.msra.mxu0 %v163
    %v165 = vand.u32 %v16, 4294901760
    %v166 = vsub.f32 %v16, %v165
    %v167 = vand.u32 %v166, 4294901760
    %v168 = vsub.f32 %v166, %v167
    %v169 = vand.u32 %v168, 4294901760
    %170 = vmatpush.msra.mxu0 %v169
    %v171 = vand.u32 %v15, 4294901760
    %v172 = vsub.f32 %v15, %v171
    %v173 = vand.u32 %v172, 4294901760
    %v174 = vsub.f32 %v172, %v173
    %v175 = vand.u32 %v174, 4294901760
    %176 = vmatpush.msra.mxu0 %v175
    %v177 = vand.u32 %v14, 4294901760
    %v178 = vsub.f32 %v14, %v177
    %v179 = vand.u32 %v178, 4294901760
    %v180 = vsub.f32 %v178, %v179
    %v181 = vand.u32 %v180, 4294901760
    %182 = vmatpush.msra.mxu0 %v181
    %v183 = vand.u32 %v13, 4294901760
    %v184 = vsub.f32 %v13, %v183
    %v185 = vand.u32 %v184, 4294901760
    %v186 = vsub.f32 %v184, %v185
    %v187 = vand.u32 %v186, 4294901760
    %188 = vmatpush.msra.mxu0 %v187
    %v189 = vand.u32 %v46, 4294901760
    %190 = vmatmul.f32.gmra.mxu0 %v189
    %v191 = vpop.f32.mrf.mxu0
    %v192 = vadd.f32 %v91, %v191
    %193 = vdwg.mxu0
    %v194 = vand.u32 %v28, 4294901760
    %v195 = vsub.f32 %v28, %v194
    %196 = vmatpush.msra.mxu0 %v195
    %v197 = vand.u32 %v27, 4294901760
    %v198 = vsub.f32 %v27, %v197
    %199 = vmatpush.msra.mxu0 %v198
    %v200 = vand.u32 %v26, 4294901760
    %v201 = vsub.f32 %v26, %v200
    %202 = vmatpush.msra.mxu0 %v201
    %v203 = vand.u32 %v25, 4294901760
    %v204 = vsub.f32 %v25, %v203
    %205 = vmatpush.msra.mxu0 %v204
    %v206 = vand.u32 %v24, 4294901760
    %v207 = vsub.f32 %v24, %v206
    %208 = vmatpush.msra.mxu0 %v207
    %v209 = vand.u32 %v23, 4294901760
    %v210 = vsub.f32 %v23, %v209
    %211 = vmatpush.msra.mxu0 %v210
    %v212 = vand.u32 %v22, 4294901760
    %v213 = vsub.f32 %v22, %v212
    %214 = vmatpush.msra.mxu0 %v213
    %v215 = vand.u32 %v21, 4294901760
    %v216 = vsub.f32 %v21, %v215
    %217 = vmatpush.msra.mxu0 %v216
    %v218 = vand.u32 %v20, 4294901760
    %v219 = vsub.f32 %v20, %v218
    %220 = vmatpush.msra.mxu0 %v219
    %v221 = vand.u32 %v19, 4294901760
    %v222 = vsub.f32 %v19, %v221
    %223 = vmatpush.msra.mxu0 %v222
    %v224 = vand.u32 %v18, 4294901760
    %v225 = vsub.f32 %v18, %v224
    %226 = vmatpush.msra.mxu0 %v225
    %v227 = vand.u32 %v17, 4294901760
    %v228 = vsub.f32 %v17, %v227
    %229 = vmatpush.msra.mxu0 %v228
    %v230 = vand.u32 %v16, 4294901760
    %v231 = vsub.f32 %v16, %v230
    %232 = vmatpush.msra.mxu0 %v231
    %v233 = vand.u32 %v15, 4294901760
    %v234 = vsub.f32 %v15, %v233
    %235 = vmatpush.msra.mxu0 %v234
    %v236 = vand.u32 %v14, 4294901760
    %v237 = vsub.f32 %v14, %v236
    %238 = vmatpush.msra.mxu0 %v237
    %v239 = vand.u32 %v13, 4294901760
    %v240 = vsub.f32 %v13, %v239
    %241 = vmatpush.msra.mxu0 %v240
    %v242 = vand.u32 %v46, 4294901760
    %v243 = vsub.f32 %v46, %v242
    %244 = vmatmul.f32.gmra.mxu0 %v243
    %v245 = vpop.f32.mrf.mxu0
    %v246 = vadd.f32 %v192, %v245
    %247 = vdwg.mxu0
    %v248 = vand.u32 %v28, 4294901760
    %249 = vmatpush.msra.mxu0 %v248
    %v250 = vand.u32 %v27, 4294901760
    %251 = vmatpush.msra.mxu0 %v250
    %v252 = vand.u32 %v26, 4294901760
    %253 = vmatpush.msra.mxu0 %v252
    %v254 = vand.u32 %v25, 4294901760
    %255 = vmatpush.msra.mxu0 %v254
    %v256 = vand.u32 %v24, 4294901760
    %257 = vmatpush.msra.mxu0 %v256
    %v258 = vand.u32 %v23, 4294901760
    %259 = vmatpush.msra.mxu0 %v258
    %v260 = vand.u32 %v22, 4294901760
    %261 = vmatpush.msra.mxu0 %v260
    %v262 = vand.u32 %v21, 4294901760
    %263 = vmatpush.msra.mxu0 %v262
    %v264 = vand.u32 %v20, 4294901760
    %265 = vmatpush.msra.mxu0 %v264
    %v266 = vand.u32 %v19, 4294901760
    %267 = vmatpush.msra.mxu0 %v266
    %v268 = vand.u32 %v18, 4294901760
    %269 = vmatpush.msra.mxu0 %v268
    %v270 = vand.u32 %v17, 4294901760
    %271 = vmatpush.msra.mxu0 %v270
    %v272 = vand.u32 %v16, 4294901760
    %273 = vmatpush.msra.mxu0 %v272
    %v274 = vand.u32 %v15, 4294901760
    %275 = vmatpush.msra.mxu0 %v274
    %v276 = vand.u32 %v14, 4294901760
    %277 = vmatpush.msra.mxu0 %v276
    %v278 = vand.u32 %v13, 4294901760
    %279 = vmatpush.msra.mxu0 %v278
    %v280 = vand.u32 %v46, 4294901760
    %v281 = vsub.f32 %v46, %v280
    %v282 = vand.u32 %v281, 4294901760
    %283 = vmatmul.f32.gmra.mxu0 %v282
    %v284 = vpop.f32.mrf.mxu0
    %v285 = vadd.f32 %v246, %v284
    %286 = vdwg.mxu0
    %v287 = vand.u32 %v28, 4294901760
    %v288 = vsub.f32 %v28, %v287
    %v289 = vand.u32 %v288, 4294901760
    %290 = vmatpush.msra.mxu0 %v289
    %v291 = vand.u32 %v27, 4294901760
    %v292 = vsub.f32 %v27, %v291
    %v293 = vand.u32 %v292, 4294901760
    %294 = vmatpush.msra.mxu0 %v293
    %v295 = vand.u32 %v26, 4294901760
    %v296 = vsub.f32 %v26, %v295
    %v297 = vand.u32 %v296, 4294901760
    %298 = vmatpush.msra.mxu0 %v297
    %v299 = vand.u32 %v25, 4294901760
    %v300 = vsub.f32 %v25, %v299
    %v301 = vand.u32 %v300, 4294901760
    %302 = vmatpush.msra.mxu0 %v301
    %v303 = vand.u32 %v24, 4294901760
    %v304 = vsub.f32 %v24, %v303
    %v305 = vand.u32 %v304, 4294901760
    %306 = vmatpush.msra.mxu0 %v305
    %v307 = vand.u32 %v23, 4294901760
    %v308 = vsub.f32 %v23, %v307
    %v309 = vand.u32 %v308, 4294901760
    %310 = vmatpush.msra.mxu0 %v309
    %v311 = vand.u32 %v22, 4294901760
    %v312 = vsub.f32 %v22, %v311
    %v313 = vand.u32 %v312, 4294901760
    %314 = vmatpush.msra.mxu0 %v313
    %v315 = vand.u32 %v21, 4294901760
    %v316 = vsub.f32 %v21, %v315
    %v317 = vand.u32 %v316, 4294901760
    %318 = vmatpush.msra.mxu0 %v317
    %v319 = vand.u32 %v20, 4294901760
    %v320 = vsub.f32 %v20, %v319
    %v321 = vand.u32 %v320, 4294901760
    %322 = vmatpush.msra.mxu0 %v321
    %v323 = vand.u32 %v19, 4294901760
    %v324 = vsub.f32 %v19, %v323
    %v325 = vand.u32 %v324, 4294901760
    %326 = vmatpush.msra.mxu0 %v325
    %v327 = vand.u32 %v18, 4294901760
    %v328 = vsub.f32 %v18, %v327
    %v329 = vand.u32 %v328, 4294901760
    %330 = vmatpush.msra.mxu0 %v329
    %v331 = vand.u32 %v17, 4294901760
    %v332 = vsub.f32 %v17, %v331
    %v333 = vand.u32 %v332, 4294901760
    %334 = vmatpush.msra.mxu0 %v333
    %v335 = vand.u32 %v16, 4294901760
    %v336 = vsub.f32 %v16, %v335
    %v337 = vand.u32 %v336, 4294901760
    %338 = vmatpush.msra.mxu0 %v337
    %v339 = vand.u32 %v15, 4294901760
    %v340 = vsub.f32 %v15, %v339
    %v341 = vand.u32 %v340, 4294901760
    %342 = vmatpush.msra.mxu0 %v341
    %v343 = vand.u32 %v14, 4294901760
    %v344 = vsub.f32 %v14, %v343
    %v345 = vand.u32 %v344, 4294901760
    %346 = vmatpush.msra.mxu0 %v345
    %v347 = vand.u32 %v13, 4294901760
    %v348 = vsub.f32 %v13, %v347
    %v349 = vand.u32 %v348, 4294901760
    %350 = vmatpush.msra.mxu0 %v349
    %v351 = vand.u32 %v46, 4294901760
    %352 = vmatmul.f32.gmra.mxu0 %v351
    %v353 = vpop.f32.mrf.mxu0
    %v354 = vadd.f32 %v285, %v353
    %355 = vdwg.mxu0
    %v356 = vand.u32 %v28, 4294901760
    %357 = vmatpush.msra.mxu0 %v356
    %v358 = vand.u32 %v27, 4294901760
    %359 = vmatpush.msra.mxu0 %v358
    %v360 = vand.u32 %v26, 4294901760
    %361 = vmatpush.msra.mxu0 %v360
    %v362 = vand.u32 %v25, 4294901760
    %363 = vmatpush.msra.mxu0 %v362
    %v364 = vand.u32 %v24, 4294901760
    %365 = vmatpush.msra.mxu0 %v364
    %v366 = vand.u32 %v23, 4294901760
    %367 = vmatpush.msra.mxu0 %v366
    %v368 = vand.u32 %v22, 4294901760
    %369 = vmatpush.msra.mxu0 %v368
    %v370 = vand.u32 %v21, 4294901760
    %371 = vmatpush.msra.mxu0 %v370
    %v372 = vand.u32 %v20, 4294901760
    %373 = vmatpush.msra.mxu0 %v372
    %v374 = vand.u32 %v19, 4294901760
    %375 = vmatpush.msra.mxu0 %v374
    %v376 = vand.u32 %v18, 4294901760
    %377 = vmatpush.msra.mxu0 %v376
    %v378 = vand.u32 %v17, 4294901760
    %379 = vmatpush.msra.mxu0 %v378
    %v380 = vand.u32 %v16, 4294901760
    %381 = vmatpush.msra.mxu0 %v380
    %v382 = vand.u32 %v15, 4294901760
    %383 = vmatpush.msra.mxu0 %v382
    %v384 = vand.u32 %v14, 4294901760
    %385 = vmatpush.msra.mxu0 %v384
    %v386 = vand.u32 %v13, 4294901760
    %387 = vmatpush.msra.mxu0 %v386
    %v388 = vand.u32 %v46, 4294901760
    %389 = vmatmul.f32.gmra.mxu0 %v388
    %v390 = vpop.f32.mrf.mxu0
    %v391 = vadd.f32 %v354, %v390
    %392 = vdwg.mxu0
    %393 = vmatpush.msra.mxu0 0.0
    %394 = vmatpush.msra.mxu0 0.0
    %395 = vmatpush.msra.mxu0 0.0
    %396 = vmatpush.msra.mxu0 0.0
    %397 = vmatpush.msra.mxu0 0.0
    %398 = vmatpush.msra.mxu0 0.0
    %399 = vmatpush.msra.mxu0 0.0
    %400 = vmatpush.msra.mxu0 0.0
    %401 = vmatpush.msra.mxu0 0.0
    %402 = vmatpush.msra.mxu0 0.0
    %403 = vmatpush.msra.mxu0 0.0
    %404 = vmatpush.msra.mxu0 0.0
    %405 = vmatpush.msra.mxu0 0.0
    %406 = vmatpush.msra.mxu0 0.0
    %v407 = vand.u32 %v30, 4294901760
    %408 = vmatpush.msra.mxu0 %v407
    %v409 = vand.u32 %v29, 4294901760
    %410 = vmatpush.msra.mxu0 %v409
    %v411 = vand.u32 %v50, 4294901760
    %v412 = vsub.f32 %v50, %v411
    %v413 = vand.u32 %v412, 4294901760
    %v414 = vsub.f32 %v412, %v413
    %v415 = vand.u32 %v414, 4294901760
    %416 = vmatmul.f32.gmra.mxu0 %v415
    %v417 = vpop.f32.mrf.mxu0
    %v418 = vadd.f32 %v391, %v417
    %419 = vdwg.mxu0
    %420 = vmatpush.msra.mxu0 0.0
    %421 = vmatpush.msra.mxu0 0.0
    %422 = vmatpush.msra.mxu0 0.0
    %423 = vmatpush.msra.mxu0 0.0
    %424 = vmatpush.msra.mxu0 0.0
    %425 = vmatpush.msra.mxu0 0.0
    %426 = vmatpush.msra.mxu0 0.0
    %427 = vmatpush.msra.mxu0 0.0
    %428 = vmatpush.msra.mxu0 0.0
    %429 = vmatpush.msra.mxu0 0.0
    %430 = vmatpush.msra.mxu0 0.0
    %431 = vmatpush.msra.mxu0 0.0
    %432 = vmatpush.msra.mxu0 0.0
    %433 = vmatpush.msra.mxu0 0.0
    %v434 = vand.u32 %v30, 4294901760
    %v435 = vsub.f32 %v30, %v434
    %v436 = vand.u32 %v435, 4294901760
    %v437 = vsub.f32 %v435, %v436
    %v438 = vand.u32 %v437, 4294901760
    %439 = vmatpush.msra.mxu0 %v438
    %v440 = vand.u32 %v29, 4294901760
    %v441 = vsub.f32 %v29, %v440
    %v442 = vand.u32 %v441, 4294901760
    %v443 = vsub.f32 %v441, %v442
    %v444 = vand.u32 %v443, 4294901760
    %445 = vmatpush.msra.mxu0 %v444
    %v446 = vand.u32 %v50, 4294901760
    %447 = vmatmul.f32.gmra.mxu0 %v446
    %v448 = vpop.f32.mrf.mxu0
    %v449 = vadd.f32 %v418, %v448
    %450 = vdwg.mxu0
    %451 = vmatpush.msra.mxu0 0.0
    %452 = vmatpush.msra.mxu0 0.0
    %453 = vmatpush.msra.mxu0 0.0
    %454 = vmatpush.msra.mxu0 0.0
    %455 = vmatpush.msra.mxu0 0.0
    %456 = vmatpush.msra.mxu0 0.0
    %457 = vmatpush.msra.mxu0 0.0
    %458 = vmatpush.msra.mxu0 0.0
    %459 = vmatpush.msra.mxu0 0.0
    %460 = vmatpush.msra.mxu0 0.0
    %461 = vmatpush.msra.mxu0 0.0
    %462 = vmatpush.msra.mxu0 0.0
    %463 = vmatpush.msra.mxu0 0.0
    %464 = vmatpush.msra.mxu0 0.0
    %v465 = vand.u32 %v30, 4294901760
    %v466 = vsub.f32 %v30, %v465
    %467 = vmatpush.msra.mxu0 %v466
    %v468 = vand.u32 %v29, 4294901760
    %v469 = vsub.f32 %v29, %v468
    %470 = vmatpush.msra.mxu0 %v469
    %v471 = vand.u32 %v50, 4294901760
    %v472 = vsub.f32 %v50, %v471
    %473 = vmatmul.f32.gmra.mxu0 %v472
    %v474 = vpop.f32.mrf.mxu0
    %v475 = vadd.f32 %v449, %v474
    %476 = vdwg.mxu0
    %477 = vmatpush.msra.mxu0 0.0
    %478 = vmatpush.msra.mxu0 0.0
    %479 = vmatpush.msra.mxu0 0.0
    %480 = vmatpush.msra.mxu0 0.0
    %481 = vmatpush.msra.mxu0 0.0
    %482 = vmatpush.msra.mxu0 0.0
    %483 = vmatpush.msra.mxu0 0.0
    %484 = vmatpush.msra.mxu0 0.0
    %485 = vmatpush.msra.mxu0 0.0
    %486 = vmatpush.msra.mxu0 0.0
    %487 = vmatpush.msra.mxu0 0.0
    %488 = vmatpush.msra.mxu0 0.0
    %489 = vmatpush.msra.mxu0 0.0
    %490 = vmatpush.msra.mxu0 0.0
    %v491 = vand.u32 %v30, 4294901760
    %492 = vmatpush.msra.mxu0 %v491
    %v493 = vand.u32 %v29, 4294901760
    %494 = vmatpush.msra.mxu0 %v493
    %v495 = vand.u32 %v50, 4294901760
    %v496 = vsub.f32 %v50, %v495
    %v497 = vand.u32 %v496, 4294901760
    %498 = vmatmul.f32.gmra.mxu0 %v497
    %v499 = vpop.f32.mrf.mxu0
    %v500 = vadd.f32 %v475, %v499
    %501 = vdwg.mxu0
    %502 = vmatpush.msra.mxu0 0.0
    %503 = vmatpush.msra.mxu0 0.0
    %504 = vmatpush.msra.mxu0 0.0
    %505 = vmatpush.msra.mxu0 0.0
    %506 = vmatpush.msra.mxu0 0.0
    %507 = vmatpush.msra.mxu0 0.0
    %508 = vmatpush.msra.mxu0 0.0
    %509 = vmatpush.msra.mxu0 0.0
    %510 = vmatpush.msra.mxu0 0.0
    %511 = vmatpush.msra.mxu0 0.0
    %512 = vmatpush.msra.mxu0 0.0
    %513 = vmatpush.msra.mxu0 0.0
    %514 = vmatpush.msra.mxu0 0.0
    %515 = vmatpush.msra.mxu0 0.0
    %v516 = vand.u32 %v30, 4294901760
    %v517 = vsub.f32 %v30, %v516
    %v518 = vand.u32 %v517, 4294901760
    %519 = vmatpush.msra.mxu0 %v518
    %v520 = vand.u32 %v29, 4294901760
    %v521 = vsub.f32 %v29, %v520
    %v522 = vand.u32 %v521, 4294901760
    %523 = vmatpush.msra.mxu0 %v522
    %v524 = vand.u32 %v50, 4294901760
    %525 = vmatmul.f32.gmra.mxu0 %v524
    %v526 = vpop.f32.mrf.mxu0
    %v527 = vadd.f32 %v500, %v526
    %528 = vdwg.mxu0
    %529 = vmatpush.msra.mxu0 0.0
    %530 = vmatpush.msra.mxu0 0.0
    %531 = vmatpush.msra.mxu0 0.0
    %532 = vmatpush.msra.mxu0 0.0
    %533 = vmatpush.msra.mxu0 0.0
    %534 = vmatpush.msra.mxu0 0.0
    %535 = vmatpush.msra.mxu0 0.0
    %536 = vmatpush.msra.mxu0 0.0
    %537 = vmatpush.msra.mxu0 0.0
    %538 = vmatpush.msra.mxu0 0.0
    %539 = vmatpush.msra.mxu0 0.0
    %540 = vmatpush.msra.mxu0 0.0
    %541 = vmatpush.msra.mxu0 0.0
    %542 = vmatpush.msra.mxu0 0.0
    %v543 = vand.u32 %v30, 4294901760
    %544 = vmatpush.msra.mxu0 %v543
    %v545 = vand.u32 %v29, 4294901760
    %546 = vmatpush.msra.mxu0 %v545
    %v547 = vand.u32 %v50, 4294901760
    %548 = vmatmul.f32.gmra.mxu0 %v547
    %v549 = vpop.f32.mrf.mxu0
    %v550 = vadd.f32 %v527, %v549
    %551 = vdwg.mxu0
    %vm552 = vcmask 123904
    %v553 = vsel %vm552, %v550, 0.0
    %v554 = vrot.slane %v553, 4
    %v555 = vadd.f32 %v553, %v554
    %v556 = vrot.slane %v555, 2
    %v557 = vadd.f32 %v555, %v556
    %v558 = vrot.slane %v557, 1
    %v559 = vadd.f32 %v557, %v558
    %v560 = vmul.f32 %v559, 0.055555556
    %v562 = vrot.slane %v550, 2
    %v564 = vsel %vm552, %v562, 0.0
    %v565 = vrot.slane %v564, 4
    %v566 = vadd.f32 %v564, %v565
    %v567 = vrot.slane %v566, 2
    %v568 = vadd.f32 %v566, %v567
    %v569 = vrot.slane %v568, 1
    %v570 = vadd.f32 %v568, %v569
    %v571 = vmul.f32 %v570, 0.055555556
    %v572 = vmul.f32 %v560, %v560
    %v573 = vsub.f32 %v571, %v572
    %v574 = vmax.f32 %v573, 0.0
    %v575 = vadd.f32 %v574, 1e-05
    %v576 = vrsqrt.pop %v575
    %v577 = vmul.f32 %v576, %v575
    %v578 = vmul.f32 %v577, %v576
    %v579 = vmul.f32 0.5, %v578
    %v580 = vsub.f32 1.5, %v579
    %v581 = vmul.f32 %v576, %v580
    %vm582 = vweird.f32 %v575
    %vm583 = vweird.f32 %v576
    %vm584 = vmor %vm582, %vm583
    %v585 = vsel %vm584, %v576, %v581
    %v586 = vsub.f32 0.0, %v560
    %v587 = vmul.f32 %v586, %v585
    %vm588 = vcmask 1040384
    %v589 = vsel %vm588, %v585, %v587
    %v591 = vsel %vm48, %v589, 0
    %v594 = vsel %vm48, %v13, 0
    %v597 = vsel %vm48, %v14, 0
    %v600 = vsel %vm48, %v15, 0
    %v603 = vsel %vm48, %v16, 0
    %v606 = vsel %vm48, %v17, 0
    %v609 = vsel %vm48, %v18, 0
    %v612 = vsel %vm48, %v19, 0
    %v615 = vsel %vm48, %v20, 0
    %v618 = vsel %vm48, %v21, 0
    %v621 = vsel %vm48, %v22, 0
    %v624 = vsel %vm48, %v23, 0
    %v627 = vsel %vm48, %v24, 0
    %v630 = vsel %vm48, %v25, 0
    %v633 = vsel %vm48, %v26, 0
    %v636 = vsel %vm48, %v27, 0
    %v639 = vsel %vm48, %v28, 0
    %v642 = vsel %vm48, %v29, 0
    %v645 = vsel %vm48, %v30, 0
    %v647 = vand.u32 %v639, 4294901760
    %648 = vmatpush.xpose.msra.mxu0 %v647
    %v649 = vand.u32 %v636, 4294901760
    %650 = vmatpush.xpose.msra.mxu0 %v649
    %v651 = vand.u32 %v633, 4294901760
    %652 = vmatpush.xpose.msra.mxu0 %v651
    %v653 = vand.u32 %v630, 4294901760
    %654 = vmatpush.xpose.msra.mxu0 %v653
    %v655 = vand.u32 %v627, 4294901760
    %656 = vmatpush.xpose.msra.mxu0 %v655
    %v657 = vand.u32 %v624, 4294901760
    %658 = vmatpush.xpose.msra.mxu0 %v657
    %v659 = vand.u32 %v621, 4294901760
    %660 = vmatpush.xpose.msra.mxu0 %v659
    %v661 = vand.u32 %v618, 4294901760
    %662 = vmatpush.xpose.msra.mxu0 %v661
    %v663 = vand.u32 %v615, 4294901760
    %664 = vmatpush.xpose.msra.mxu0 %v663
    %v665 = vand.u32 %v612, 4294901760
    %666 = vmatpush.xpose.msra.mxu0 %v665
    %v667 = vand.u32 %v609, 4294901760
    %668 = vmatpush.xpose.msra.mxu0 %v667
    %v669 = vand.u32 %v606, 4294901760
    %670 = vmatpush.xpose.msra.mxu0 %v669
    %v671 = vand.u32 %v603, 4294901760
    %672 = vmatpush.xpose.msra.mxu0 %v671
    %v673 = vand.u32 %v600, 4294901760
    %674 = vmatpush.xpose.msra.mxu0 %v673
    %v675 = vand.u32 %v597, 4294901760
    %676 = vmatpush.xpose.msra.mxu0 %v675
    %v677 = vand.u32 %v594, 4294901760
    %678 = vmatpush.xpose.msra.mxu0 %v677
    %v679 = vand.u32 %v591, 4294901760
    %v680 = vsub.f32 %v591, %v679
    %v681 = vand.u32 %v680, 4294901760
    %v682 = vsub.f32 %v680, %v681
    %v683 = vand.u32 %v682, 4294901760
    %684 = vmatmul.f32.gmra.mxu0 %v683
    %v685 = vpop.f32.mrf.mxu0
    %v686 = vadd.f32 0.0, %v685
    %687 = vdwg.mxu0
    %v688 = vand.u32 %v639, 4294901760
    %v689 = vsub.f32 %v639, %v688
    %v690 = vand.u32 %v689, 4294901760
    %v691 = vsub.f32 %v689, %v690
    %v692 = vand.u32 %v691, 4294901760
    %693 = vmatpush.xpose.msra.mxu0 %v692
    %v694 = vand.u32 %v636, 4294901760
    %v695 = vsub.f32 %v636, %v694
    %v696 = vand.u32 %v695, 4294901760
    %v697 = vsub.f32 %v695, %v696
    %v698 = vand.u32 %v697, 4294901760
    %699 = vmatpush.xpose.msra.mxu0 %v698
    %v700 = vand.u32 %v633, 4294901760
    %v701 = vsub.f32 %v633, %v700
    %v702 = vand.u32 %v701, 4294901760
    %v703 = vsub.f32 %v701, %v702
    %v704 = vand.u32 %v703, 4294901760
    %705 = vmatpush.xpose.msra.mxu0 %v704
    %v706 = vand.u32 %v630, 4294901760
    %v707 = vsub.f32 %v630, %v706
    %v708 = vand.u32 %v707, 4294901760
    %v709 = vsub.f32 %v707, %v708
    %v710 = vand.u32 %v709, 4294901760
    %711 = vmatpush.xpose.msra.mxu0 %v710
    %v712 = vand.u32 %v627, 4294901760
    %v713 = vsub.f32 %v627, %v712
    %v714 = vand.u32 %v713, 4294901760
    %v715 = vsub.f32 %v713, %v714
    %v716 = vand.u32 %v715, 4294901760
    %717 = vmatpush.xpose.msra.mxu0 %v716
    %v718 = vand.u32 %v624, 4294901760
    %v719 = vsub.f32 %v624, %v718
    %v720 = vand.u32 %v719, 4294901760
    %v721 = vsub.f32 %v719, %v720
    %v722 = vand.u32 %v721, 4294901760
    %723 = vmatpush.xpose.msra.mxu0 %v722
    %v724 = vand.u32 %v621, 4294901760
    %v725 = vsub.f32 %v621, %v724
    %v726 = vand.u32 %v725, 4294901760
    %v727 = vsub.f32 %v725, %v726
    %v728 = vand.u32 %v727, 4294901760
    %729 = vmatpush.xpose.msra.mxu0 %v728
    %v730 = vand.u32 %v618, 4294901760
    %v731 = vsub.f32 %v618, %v730
    %v732 = vand.u32 %v731, 4294901760
    %v733 = vsub.f32 %v731, %v732
    %v734 = vand.u32 %v733, 4294901760
    %735 = vmatpush.xpose.msra.mxu0 %v734
    %v736 = vand.u32 %v615, 4294901760
    %v737 = vsub.f32 %v615, %v736
    %v738 = vand.u32 %v737, 4294901760
    %v739 = vsub.f32 %v737, %v738
    %v740 = vand.u32 %v739, 4294901760
    %741 = vmatpush.xpose.msra.mxu0 %v740
    %v742 = vand.u32 %v612, 4294901760
    %v743 = vsub.f32 %v612, %v742
    %v744 = vand.u32 %v743, 4294901760
    %v745 = vsub.f32 %v743, %v744
    %v746 = vand.u32 %v745, 4294901760
    %747 = vmatpush.xpose.msra.mxu0 %v746
    %v748 = vand.u32 %v609, 4294901760
    %v749 = vsub.f32 %v609, %v748
    %v750 = vand.u32 %v749, 4294901760
    %v751 = vsub.f32 %v749, %v750
    %v752 = vand.u32 %v751, 4294901760
    %753 = vmatpush.xpose.msra.mxu0 %v752
    %v754 = vand.u32 %v606, 4294901760
    %v755 = vsub.f32 %v606, %v754
    %v756 = vand.u32 %v755, 4294901760
    %v757 = vsub.f32 %v755, %v756
    %v758 = vand.u32 %v757, 4294901760
    %759 = vmatpush.xpose.msra.mxu0 %v758
    %v760 = vand.u32 %v603, 4294901760
    %v761 = vsub.f32 %v603, %v760
    %v762 = vand.u32 %v761, 4294901760
    %v763 = vsub.f32 %v761, %v762
    %v764 = vand.u32 %v763, 4294901760
    %765 = vmatpush.xpose.msra.mxu0 %v764
    %v766 = vand.u32 %v600, 4294901760
    %v767 = vsub.f32 %v600, %v766
    %v768 = vand.u32 %v767, 4294901760
    %v769 = vsub.f32 %v767, %v768
    %v770 = vand.u32 %v769, 4294901760
    %771 = vmatpush.xpose.msra.mxu0 %v770
    %v772 = vand.u32 %v597, 4294901760
    %v773 = vsub.f32 %v597, %v772
    %v774 = vand.u32 %v773, 4294901760
    %v775 = vsub.f32 %v773, %v774
    %v776 = vand.u32 %v775, 4294901760
    %777 = vmatpush.xpose.msra.mxu0 %v776
    %v778 = vand.u32 %v594, 4294901760
    %v779 = vsub.f32 %v594, %v778
    %v780 = vand.u32 %v779, 4294901760
    %v781 = vsub.f32 %v779, %v780
    %v782 = vand.u32 %v781, 4294901760
    %783 = vmatpush.xpose.msra.mxu0 %v782
    %v784 = vand.u32 %v591, 4294901760
    %785 = vmatmul.f32.gmra.mxu0 %v784
    %v786 = vpop.f32.mrf.mxu0
    %v787 = vadd.f32 %v686, %v786
    %788 = vdwg.mxu0
    %v789 = vand.u32 %v639, 4294901760
    %v790 = vsub.f32 %v639, %v789
    %791 = vmatpush.xpose.msra.mxu0 %v790
    %v792 = vand.u32 %v636, 4294901760
    %v793 = vsub.f32 %v636, %v792
    %794 = vmatpush.xpose.msra.mxu0 %v793
    %v795 = vand.u32 %v633, 4294901760
    %v796 = vsub.f32 %v633, %v795
    %797 = vmatpush.xpose.msra.mxu0 %v796
    %v798 = vand.u32 %v630, 4294901760
    %v799 = vsub.f32 %v630, %v798
    %800 = vmatpush.xpose.msra.mxu0 %v799
    %v801 = vand.u32 %v627, 4294901760
    %v802 = vsub.f32 %v627, %v801
    %803 = vmatpush.xpose.msra.mxu0 %v802
    %v804 = vand.u32 %v624, 4294901760
    %v805 = vsub.f32 %v624, %v804
    %806 = vmatpush.xpose.msra.mxu0 %v805
    %v807 = vand.u32 %v621, 4294901760
    %v808 = vsub.f32 %v621, %v807
    %809 = vmatpush.xpose.msra.mxu0 %v808
    %v810 = vand.u32 %v618, 4294901760
    %v811 = vsub.f32 %v618, %v810
    %812 = vmatpush.xpose.msra.mxu0 %v811
    %v813 = vand.u32 %v615, 4294901760
    %v814 = vsub.f32 %v615, %v813
    %815 = vmatpush.xpose.msra.mxu0 %v814
    %v816 = vand.u32 %v612, 4294901760
    %v817 = vsub.f32 %v612, %v816
    %818 = vmatpush.xpose.msra.mxu0 %v817
    %v819 = vand.u32 %v609, 4294901760
    %v820 = vsub.f32 %v609, %v819
    %821 = vmatpush.xpose.msra.mxu0 %v820
    %v822 = vand.u32 %v606, 4294901760
    %v823 = vsub.f32 %v606, %v822
    %824 = vmatpush.xpose.msra.mxu0 %v823
    %v825 = vand.u32 %v603, 4294901760
    %v826 = vsub.f32 %v603, %v825
    %827 = vmatpush.xpose.msra.mxu0 %v826
    %v828 = vand.u32 %v600, 4294901760
    %v829 = vsub.f32 %v600, %v828
    %830 = vmatpush.xpose.msra.mxu0 %v829
    %v831 = vand.u32 %v597, 4294901760
    %v832 = vsub.f32 %v597, %v831
    %833 = vmatpush.xpose.msra.mxu0 %v832
    %v834 = vand.u32 %v594, 4294901760
    %v835 = vsub.f32 %v594, %v834
    %836 = vmatpush.xpose.msra.mxu0 %v835
    %v837 = vand.u32 %v591, 4294901760
    %v838 = vsub.f32 %v591, %v837
    %839 = vmatmul.f32.gmra.mxu0 %v838
    %v840 = vpop.f32.mrf.mxu0
    %v841 = vadd.f32 %v787, %v840
    %842 = vdwg.mxu0
    %v843 = vand.u32 %v639, 4294901760
    %844 = vmatpush.xpose.msra.mxu0 %v843
    %v845 = vand.u32 %v636, 4294901760
    %846 = vmatpush.xpose.msra.mxu0 %v845
    %v847 = vand.u32 %v633, 4294901760
    %848 = vmatpush.xpose.msra.mxu0 %v847
    %v849 = vand.u32 %v630, 4294901760
    %850 = vmatpush.xpose.msra.mxu0 %v849
    %v851 = vand.u32 %v627, 4294901760
    %852 = vmatpush.xpose.msra.mxu0 %v851
    %v853 = vand.u32 %v624, 4294901760
    %854 = vmatpush.xpose.msra.mxu0 %v853
    %v855 = vand.u32 %v621, 4294901760
    %856 = vmatpush.xpose.msra.mxu0 %v855
    %v857 = vand.u32 %v618, 4294901760
    %858 = vmatpush.xpose.msra.mxu0 %v857
    %v859 = vand.u32 %v615, 4294901760
    %860 = vmatpush.xpose.msra.mxu0 %v859
    %v861 = vand.u32 %v612, 4294901760
    %862 = vmatpush.xpose.msra.mxu0 %v861
    %v863 = vand.u32 %v609, 4294901760
    %864 = vmatpush.xpose.msra.mxu0 %v863
    %v865 = vand.u32 %v606, 4294901760
    %866 = vmatpush.xpose.msra.mxu0 %v865
    %v867 = vand.u32 %v603, 4294901760
    %868 = vmatpush.xpose.msra.mxu0 %v867
    %v869 = vand.u32 %v600, 4294901760
    %870 = vmatpush.xpose.msra.mxu0 %v869
    %v871 = vand.u32 %v597, 4294901760
    %872 = vmatpush.xpose.msra.mxu0 %v871
    %v873 = vand.u32 %v594, 4294901760
    %874 = vmatpush.xpose.msra.mxu0 %v873
    %v875 = vand.u32 %v591, 4294901760
    %v876 = vsub.f32 %v591, %v875
    %v877 = vand.u32 %v876, 4294901760
    %878 = vmatmul.f32.gmra.mxu0 %v877
    %v879 = vpop.f32.mrf.mxu0
    %v880 = vadd.f32 %v841, %v879
    %881 = vdwg.mxu0
    %v882 = vand.u32 %v639, 4294901760
    %v883 = vsub.f32 %v639, %v882
    %v884 = vand.u32 %v883, 4294901760
    %885 = vmatpush.xpose.msra.mxu0 %v884
    %v886 = vand.u32 %v636, 4294901760
    %v887 = vsub.f32 %v636, %v886
    %v888 = vand.u32 %v887, 4294901760
    %889 = vmatpush.xpose.msra.mxu0 %v888
    %v890 = vand.u32 %v633, 4294901760
    %v891 = vsub.f32 %v633, %v890
    %v892 = vand.u32 %v891, 4294901760
    %893 = vmatpush.xpose.msra.mxu0 %v892
    %v894 = vand.u32 %v630, 4294901760
    %v895 = vsub.f32 %v630, %v894
    %v896 = vand.u32 %v895, 4294901760
    %897 = vmatpush.xpose.msra.mxu0 %v896
    %v898 = vand.u32 %v627, 4294901760
    %v899 = vsub.f32 %v627, %v898
    %v900 = vand.u32 %v899, 4294901760
    %901 = vmatpush.xpose.msra.mxu0 %v900
    %v902 = vand.u32 %v624, 4294901760
    %v903 = vsub.f32 %v624, %v902
    %v904 = vand.u32 %v903, 4294901760
    %905 = vmatpush.xpose.msra.mxu0 %v904
    %v906 = vand.u32 %v621, 4294901760
    %v907 = vsub.f32 %v621, %v906
    %v908 = vand.u32 %v907, 4294901760
    %909 = vmatpush.xpose.msra.mxu0 %v908
    %v910 = vand.u32 %v618, 4294901760
    %v911 = vsub.f32 %v618, %v910
    %v912 = vand.u32 %v911, 4294901760
    %913 = vmatpush.xpose.msra.mxu0 %v912
    %v914 = vand.u32 %v615, 4294901760
    %v915 = vsub.f32 %v615, %v914
    %v916 = vand.u32 %v915, 4294901760
    %917 = vmatpush.xpose.msra.mxu0 %v916
    %v918 = vand.u32 %v612, 4294901760
    %v919 = vsub.f32 %v612, %v918
    %v920 = vand.u32 %v919, 4294901760
    %921 = vmatpush.xpose.msra.mxu0 %v920
    %v922 = vand.u32 %v609, 4294901760
    %v923 = vsub.f32 %v609, %v922
    %v924 = vand.u32 %v923, 4294901760
    %925 = vmatpush.xpose.msra.mxu0 %v924
    %v926 = vand.u32 %v606, 4294901760
    %v927 = vsub.f32 %v606, %v926
    %v928 = vand.u32 %v927, 4294901760
    %929 = vmatpush.xpose.msra.mxu0 %v928
    %v930 = vand.u32 %v603, 4294901760
    %v931 = vsub.f32 %v603, %v930
    %v932 = vand.u32 %v931, 4294901760
    %933 = vmatpush.xpose.msra.mxu0 %v932
    %v934 = vand.u32 %v600, 4294901760
    %v935 = vsub.f32 %v600, %v934
    %v936 = vand.u32 %v935, 4294901760
    %937 = vmatpush.xpose.msra.mxu0 %v936
    %v938 = vand.u32 %v597, 4294901760
    %v939 = vsub.f32 %v597, %v938
    %v940 = vand.u32 %v939, 4294901760
    %941 = vmatpush.xpose.msra.mxu0 %v940
    %v942 = vand.u32 %v594, 4294901760
    %v943 = vsub.f32 %v594, %v942
    %v944 = vand.u32 %v943, 4294901760
    %945 = vmatpush.xpose.msra.mxu0 %v944
    %v946 = vand.u32 %v591, 4294901760
    %947 = vmatmul.f32.gmra.mxu0 %v946
    %v948 = vpop.f32.mrf.mxu0
    %v949 = vadd.f32 %v880, %v948
    %950 = vdwg.mxu0
    %v951 = vand.u32 %v639, 4294901760
    %952 = vmatpush.xpose.msra.mxu0 %v951
    %v953 = vand.u32 %v636, 4294901760
    %954 = vmatpush.xpose.msra.mxu0 %v953
    %v955 = vand.u32 %v633, 4294901760
    %956 = vmatpush.xpose.msra.mxu0 %v955
    %v957 = vand.u32 %v630, 4294901760
    %958 = vmatpush.xpose.msra.mxu0 %v957
    %v959 = vand.u32 %v627, 4294901760
    %960 = vmatpush.xpose.msra.mxu0 %v959
    %v961 = vand.u32 %v624, 4294901760
    %962 = vmatpush.xpose.msra.mxu0 %v961
    %v963 = vand.u32 %v621, 4294901760
    %964 = vmatpush.xpose.msra.mxu0 %v963
    %v965 = vand.u32 %v618, 4294901760
    %966 = vmatpush.xpose.msra.mxu0 %v965
    %v967 = vand.u32 %v615, 4294901760
    %968 = vmatpush.xpose.msra.mxu0 %v967
    %v969 = vand.u32 %v612, 4294901760
    %970 = vmatpush.xpose.msra.mxu0 %v969
    %v971 = vand.u32 %v609, 4294901760
    %972 = vmatpush.xpose.msra.mxu0 %v971
    %v973 = vand.u32 %v606, 4294901760
    %974 = vmatpush.xpose.msra.mxu0 %v973
    %v975 = vand.u32 %v603, 4294901760
    %976 = vmatpush.xpose.msra.mxu0 %v975
    %v977 = vand.u32 %v600, 4294901760
    %978 = vmatpush.xpose.msra.mxu0 %v977
    %v979 = vand.u32 %v597, 4294901760
    %980 = vmatpush.xpose.msra.mxu0 %v979
    %v981 = vand.u32 %v594, 4294901760
    %982 = vmatpush.xpose.msra.mxu0 %v981
    %v983 = vand.u32 %v591, 4294901760
    %984 = vmatmul.f32.gmra.mxu0 %v983
    %v985 = vpop.f32.mrf.mxu0
    %v986 = vadd.f32 %v949, %v985
    %987 = vdwg.mxu0
    %988 = vmatpush.xpose.msra.mxu0 0.0
    %989 = vmatpush.xpose.msra.mxu0 0.0
    %990 = vmatpush.xpose.msra.mxu0 0.0
    %991 = vmatpush.xpose.msra.mxu0 0.0
    %992 = vmatpush.xpose.msra.mxu0 0.0
    %993 = vmatpush.xpose.msra.mxu0 0.0
    %994 = vmatpush.xpose.msra.mxu0 0.0
    %995 = vmatpush.xpose.msra.mxu0 0.0
    %996 = vmatpush.xpose.msra.mxu0 0.0
    %997 = vmatpush.xpose.msra.mxu0 0.0
    %998 = vmatpush.xpose.msra.mxu0 0.0
    %999 = vmatpush.xpose.msra.mxu0 0.0
    %1000 = vmatpush.xpose.msra.mxu0 0.0
    %1001 = vmatpush.xpose.msra.mxu0 0.0
    %v1002 = vand.u32 %v645, 4294901760
    %1003 = vmatpush.xpose.msra.mxu0 %v1002
    %v1004 = vand.u32 %v642, 4294901760
    %1005 = vmatpush.xpose.msra.mxu0 %v1004
    %v1006 = vand.u32 %v591, 4294901760
    %v1007 = vsub.f32 %v591, %v1006
    %v1008 = vand.u32 %v1007, 4294901760
    %v1009 = vsub.f32 %v1007, %v1008
    %v1010 = vand.u32 %v1009, 4294901760
    %1011 = vmatmul.f32.gmra.mxu0 %v1010
    %v1012 = vpop.f32.mrf.mxu0
    %v1013 = vadd.f32 0.0, %v1012
    %1014 = vdwg.mxu0
    %1015 = vmatpush.xpose.msra.mxu0 0.0
    %1016 = vmatpush.xpose.msra.mxu0 0.0
    %1017 = vmatpush.xpose.msra.mxu0 0.0
    %1018 = vmatpush.xpose.msra.mxu0 0.0
    %1019 = vmatpush.xpose.msra.mxu0 0.0
    %1020 = vmatpush.xpose.msra.mxu0 0.0
    %1021 = vmatpush.xpose.msra.mxu0 0.0
    %1022 = vmatpush.xpose.msra.mxu0 0.0
    %1023 = vmatpush.xpose.msra.mxu0 0.0
    %1024 = vmatpush.xpose.msra.mxu0 0.0
    %1025 = vmatpush.xpose.msra.mxu0 0.0
    %1026 = vmatpush.xpose.msra.mxu0 0.0
    %1027 = vmatpush.xpose.msra.mxu0 0.0
    %1028 = vmatpush.xpose.msra.mxu0 0.0
    %v1029 = vand.u32 %v645, 4294901760
    %v1030 = vsub.f32 %v645, %v1029
    %v1031 = vand.u32 %v1030, 4294901760
    %v1032 = vsub.f32 %v1030, %v1031
    %v1033 = vand.u32 %v1032, 4294901760
    %1034 = vmatpush.xpose.msra.mxu0 %v1033
    %v1035 = vand.u32 %v642, 4294901760
    %v1036 = vsub.f32 %v642, %v1035
    %v1037 = vand.u32 %v1036, 4294901760
    %v1038 = vsub.f32 %v1036, %v1037
    %v1039 = vand.u32 %v1038, 4294901760
    %1040 = vmatpush.xpose.msra.mxu0 %v1039
    %v1041 = vand.u32 %v591, 4294901760
    %1042 = vmatmul.f32.gmra.mxu0 %v1041
    %v1043 = vpop.f32.mrf.mxu0
    %v1044 = vadd.f32 %v1013, %v1043
    %1045 = vdwg.mxu0
    %1046 = vmatpush.xpose.msra.mxu0 0.0
    %1047 = vmatpush.xpose.msra.mxu0 0.0
    %1048 = vmatpush.xpose.msra.mxu0 0.0
    %1049 = vmatpush.xpose.msra.mxu0 0.0
    %1050 = vmatpush.xpose.msra.mxu0 0.0
    %1051 = vmatpush.xpose.msra.mxu0 0.0
    %1052 = vmatpush.xpose.msra.mxu0 0.0
    %1053 = vmatpush.xpose.msra.mxu0 0.0
    %1054 = vmatpush.xpose.msra.mxu0 0.0
    %1055 = vmatpush.xpose.msra.mxu0 0.0
    %1056 = vmatpush.xpose.msra.mxu0 0.0
    %1057 = vmatpush.xpose.msra.mxu0 0.0
    %1058 = vmatpush.xpose.msra.mxu0 0.0
    %1059 = vmatpush.xpose.msra.mxu0 0.0
    %v1060 = vand.u32 %v645, 4294901760
    %v1061 = vsub.f32 %v645, %v1060
    %1062 = vmatpush.xpose.msra.mxu0 %v1061
    %v1063 = vand.u32 %v642, 4294901760
    %v1064 = vsub.f32 %v642, %v1063
    %1065 = vmatpush.xpose.msra.mxu0 %v1064
    %v1066 = vand.u32 %v591, 4294901760
    %v1067 = vsub.f32 %v591, %v1066
    %1068 = vmatmul.f32.gmra.mxu0 %v1067
    %v1069 = vpop.f32.mrf.mxu0
    %v1070 = vadd.f32 %v1044, %v1069
    %1071 = vdwg.mxu0
    %1072 = vmatpush.xpose.msra.mxu0 0.0
    %1073 = vmatpush.xpose.msra.mxu0 0.0
    %1074 = vmatpush.xpose.msra.mxu0 0.0
    %1075 = vmatpush.xpose.msra.mxu0 0.0
    %1076 = vmatpush.xpose.msra.mxu0 0.0
    %1077 = vmatpush.xpose.msra.mxu0 0.0
    %1078 = vmatpush.xpose.msra.mxu0 0.0
    %1079 = vmatpush.xpose.msra.mxu0 0.0
    %1080 = vmatpush.xpose.msra.mxu0 0.0
    %1081 = vmatpush.xpose.msra.mxu0 0.0
    %1082 = vmatpush.xpose.msra.mxu0 0.0
    %1083 = vmatpush.xpose.msra.mxu0 0.0
    %1084 = vmatpush.xpose.msra.mxu0 0.0
    %1085 = vmatpush.xpose.msra.mxu0 0.0
    %v1086 = vand.u32 %v645, 4294901760
    %1087 = vmatpush.xpose.msra.mxu0 %v1086
    %v1088 = vand.u32 %v642, 4294901760
    %1089 = vmatpush.xpose.msra.mxu0 %v1088
    %v1090 = vand.u32 %v591, 4294901760
    %v1091 = vsub.f32 %v591, %v1090
    %v1092 = vand.u32 %v1091, 4294901760
    %1093 = vmatmul.f32.gmra.mxu0 %v1092
    %v1094 = vpop.f32.mrf.mxu0
    %v1095 = vadd.f32 %v1070, %v1094
    %1096 = vdwg.mxu0
    %1097 = vmatpush.xpose.msra.mxu0 0.0
    %1098 = vmatpush.xpose.msra.mxu0 0.0
    %1099 = vmatpush.xpose.msra.mxu0 0.0
    %1100 = vmatpush.xpose.msra.mxu0 0.0
    %1101 = vmatpush.xpose.msra.mxu0 0.0
    %1102 = vmatpush.xpose.msra.mxu0 0.0
    %1103 = vmatpush.xpose.msra.mxu0 0.0
    %1104 = vmatpush.xpose.msra.mxu0 0.0
    %1105 = vmatpush.xpose.msra.mxu0 0.0
    %1106 = vmatpush.xpose.msra.mxu0 0.0
    %1107 = vmatpush.xpose.msra.mxu0 0.0
    %1108 = vmatpush.xpose.msra.mxu0 0.0
    %1109 = vmatpush.xpose.msra.mxu0 0.0
    %1110 = vmatpush.xpose.msra.mxu0 0.0
    %v1111 = vand.u32 %v645, 4294901760
    %v1112 = vsub.f32 %v645, %v1111
    %v1113 = vand.u32 %v1112, 4294901760
    %1114 = vmatpush.xpose.msra.mxu0 %v1113
    %v1115 = vand.u32 %v642, 4294901760
    %v1116 = vsub.f32 %v642, %v1115
    %v1117 = vand.u32 %v1116, 4294901760
    %1118 = vmatpush.xpose.msra.mxu0 %v1117
    %v1119 = vand.u32 %v591, 4294901760
    %1120 = vmatmul.f32.gmra.mxu0 %v1119
    %v1121 = vpop.f32.mrf.mxu0
    %v1122 = vadd.f32 %v1095, %v1121
    %1123 = vdwg.mxu0
    %1124 = vmatpush.xpose.msra.mxu0 0.0
    %1125 = vmatpush.xpose.msra.mxu0 0.0
    %1126 = vmatpush.xpose.msra.mxu0 0.0
    %1127 = vmatpush.xpose.msra.mxu0 0.0
    %1128 = vmatpush.xpose.msra.mxu0 0.0
    %1129 = vmatpush.xpose.msra.mxu0 0.0
    %1130 = vmatpush.xpose.msra.mxu0 0.0
    %1131 = vmatpush.xpose.msra.mxu0 0.0
    %1132 = vmatpush.xpose.msra.mxu0 0.0
    %1133 = vmatpush.xpose.msra.mxu0 0.0
    %1134 = vmatpush.xpose.msra.mxu0 0.0
    %1135 = vmatpush.xpose.msra.mxu0 0.0
    %1136 = vmatpush.xpose.msra.mxu0 0.0
    %1137 = vmatpush.xpose.msra.mxu0 0.0
    %v1138 = vand.u32 %v645, 4294901760
    %1139 = vmatpush.xpose.msra.mxu0 %v1138
    %v1140 = vand.u32 %v642, 4294901760
    %1141 = vmatpush.xpose.msra.mxu0 %v1140
    %v1142 = vand.u32 %v591, 4294901760
    %1143 = vmatmul.f32.gmra.mxu0 %v1142
    %v1144 = vpop.f32.mrf.mxu0
    %v1145 = vadd.f32 %v1122, %v1144
    %1146 = vdwg.mxu0
    %v1147 = vperm.slane %v986, 0
    %v1148 = vperm.slane %v1145, 0
    %v1151 = vrot.slane %v1148, 6
    %v1152 = vsel %vm45, %v1147, %v1151
    %v1154 = vmul.f32 %v12, %v1152
    %v1155 = vperm.slane %v986, 1
    %v1156 = vperm.slane %v1145, 1
    %v1159 = vrot.slane %v1156, 6
    %v1160 = vsel %vm45, %v1155, %v1159
    %v1162 = vadd.f32 %v1154, %v1160
    %vm1163 = vcmask 125954
    %vm1164 = vmor %vm1163, %vm45
    %1165 = vst.msk [vmem:[#allocation2] sm:$0xf] %vm1164, %v1162
    // Predicated region
    $region10: #{tpu_custom_call.1} parent=1 // pred_check
      _
    $region11: #{tpu_custom_call.1} parent=1 // pred_check_branch
      %1167 = sbr.rel (0) target = $region13
    $region12: #{tpu_custom_call.1} parent=1 // pred_region
      %1169 = vsyncadd [#allocation3], 0
      %s1171 = sshll.u32 [#allocation2], 4
      %s1172 = int_to_ptr.vmem [resolvable:$true] %s1171
      %s1173 = sshll.u32 %s2, 4
      %s1174 = int_to_ptr.hbm [resolvable:$true] %s1173
      %1176 = dma.vmem_to_hbm [thread:$0]  %s1172, 64, %s1174, [#allocation3]
    $region13: #{tpu_custom_call.1} parent=1 // pred_fallthru
      _
    // Predicated region
    $region14: #{tpu_custom_call.1} parent=1 // pred_check
      _
    $region15: #{tpu_custom_call.1} parent=1 // pred_check_branch
      %1178 = sbr.rel (0) target = $region17
    $region16: #{tpu_custom_call.1} parent=1 // pred_region
      %1180 = dma.done [#allocation3], 64
    $region17: #{tpu_custom_call.1} parent=1 // pred_fallthru
      _
    %1181 = vsyncpa [#allocation3], 1

</llo_original>
